<compile_context>
chip_gen: v5e
topology: v5e:2x2
jax: 0.10.0
libtpu: 0.0.40
codegen_flags: <defaults>
</compile_context>

<pallas_src>
import jax
import jax.numpy as jnp
from jax.experimental import pallas as pl
from jax.experimental.pallas import tpu as pltpu

LANES = 128
MAX_BLOCK_ROWS = 1024  # (1024, 128) f32 block = 512 KiB per input per buffer


def _cdiv(a, b):
    return -(-a // b)


def _make_smape_kernel(n_elems, block_rows, steps_per_core, needs_mask):
    block_elems = block_rows * LANES

    def kernel(p_ref, t_ref, o_ref, acc_ref):
        c = pl.program_id(0)
        i = pl.program_id(1)

        @pl.when(i == 0)
        def _():
            acc_ref[...] = jnp.zeros_like(acc_ref)

        p = p_ref[...].astype(jnp.float32)
        t = t_ref[...].astype(jnp.float32)

        if needs_mask:
            blk = c * steps_per_core + i          # un-clamped logical block id
            base = blk * block_elems
            row_ids = jax.lax.broadcasted_iota(jnp.int32, (block_rows, LANES), 0)
            lane_ids = jax.lax.broadcasted_iota(jnp.int32, (block_rows, LANES), 1)
            elem_idx = base + row_ids * LANES + lane_ids
            in_bounds = elem_idx < n_elems
            zero = jnp.float32(0.0)
            p = jnp.where(in_bounds, p, zero)
            t = jnp.where(in_bounds, t, zero)

        eps = jnp.float32(1e-10)
        num = jnp.abs(p - t)
        den = jnp.abs(t) + jnp.abs(p) + eps
        # EUP approx reciprocal + one Newton-Raphson refinement: keeps the VPU
        # light while retaining ~full f32 accuracy.
        r = pl.reciprocal(den, approx=True)
        r = r * (jnp.float32(2.0) - den * r)
        # |p - t| / ((|p|+|t|+eps)/2) * 100  ==  |p - t| * 200 / (|p|+|t|+eps)
        acc_ref[...] += num * r * jnp.float32(200.0)

        @pl.when(i == pl.num_programs(1) - 1)
        def _():
            o_ref[0, 0] = jnp.sum(acc_ref[...])

    return kernel


@jax.jit
def smape_loss(y_pred, y_true):
    assert y_pred.shape == y_true.shape, "y_pred / y_true must match"
    n_elems = y_pred.size

    p_flat = jnp.ravel(y_pred)
    t_flat = jnp.ravel(y_true)

    rows = _cdiv(n_elems, LANES)
    lane_pad = rows * LANES - n_elems
    if lane_pad:
        # Tail-only pad (< 128 elems); padded region is also masked in-kernel.
        p_flat = jnp.pad(p_flat, (0, lane_pad))
        t_flat = jnp.pad(t_flat, (0, lane_pad))
    p2 = p_flat.reshape(rows, LANES)
    t2 = t_flat.reshape(rows, LANES)

    block_rows = rows if rows <= MAX_BLOCK_ROWS else MAX_BLOCK_ROWS
    grid_rows = _cdiv(rows, block_rows)
    n_cores = 2 if grid_rows >= 2 else 1      # v7x megacore split; no-op on v5e/v6e
    steps_per_core = _cdiv(grid_rows, n_cores)
    covered = n_cores * steps_per_core * block_rows * LANES
    needs_mask = covered != n_elems

    kernel = _make_smape_kernel(n_elems, block_rows, steps_per_core, needs_mask)

    def in_map(c, i):
        # Clamp so phantom steps (ragged per-core split) re-read a valid block;
        # their contribution is zeroed by the in-kernel mask.
        blk = jnp.minimum(c * steps_per_core + i, grid_rows - 1)
        return (blk, 0)

    partials = pl.pallas_call(
        kernel,
        out_shape=jax.ShapeDtypeStruct((n_cores, 1), jnp.float32),
        grid_spec=pltpu.PrefetchScalarGridSpec(
            num_scalar_prefetch=0,
            grid=(n_cores, steps_per_core),
            in_specs=[
                pl.BlockSpec((block_rows, LANES), in_map),
                pl.BlockSpec((block_rows, LANES), in_map),
            ],
            out_specs=pl.BlockSpec((1, 1), lambda c, i: (c, 0),
                                   memory_space=pltpu.SMEM),
            scratch_shapes=[pltpu.VMEM((block_rows, LANES), jnp.float32)],
        ),
        compiler_params=pltpu.CompilerParams(
            dimension_semantics=("parallel", "arbitrary"),
        ),
    )(p2, t2)

    # Mean over the TRUE element count (masked / padded elements contribute 0).
    return jnp.sum(partials) / jnp.float32(n_elems)


def smape_loss_ref(y_pred, y_true):
    eps = 1e-10
    p = y_pred.astype(jnp.float32)
    t = y_true.astype(jnp.float32)
    num = jnp.abs(p - t)
    den = (jnp.abs(t) + jnp.abs(p) + eps) / 2.0
    return jnp.mean(num / den * 100.0)


if __name__ == "__main__":
    key = jax.random.PRNGKey(0)
    k1, k2 = jax.random.split(key)
    shape = (2, 4, 16, 16)   # NCHW-like prediction target
    y_pred = jax.random.normal(k1, shape, dtype=jnp.float32)
    y_true = jax.random.normal(k2, shape, dtype=jnp.float32)

    out = smape_loss(y_pred, y_true)
    out = jax.block_until_ready(out)

    ref = smape_loss_ref(y_pred, y_true)
    assert jnp.allclose(out, ref, rtol=1e-4, atol=1e-3), (out, ref)

    # Larger shape with a ragged tail: exercises the masked path, the clamped
    # phantom step, and the 2-way parallel split.
    k3, k4 = jax.random.split(k2)
    big_shape = (3, 5, 137, 113)   # 232,215 elements — not a multiple of 128
    yp2 = jax.random.normal(k3, big_shape, dtype=jnp.float32)
    yt2 = jax.random.normal(k4, big_shape, dtype=jnp.float32)
    out2 = jax.block_until_ready(smape_loss(yp2, yt2))
    ref2 = smape_loss_ref(yp2, yt2)
    assert jnp.allclose(out2, ref2, rtol=1e-4, atol=1e-3), (out2, ref2)

    print("KERNEL_OK")
</pallas_src>

<mosaic_0001>
module attributes {stable_mosaic.version = 11 : i64} {
  func.func @kernel(%arg0: i32, %arg1: i32, %arg2: memref<16x128xf32, #tpu.memory_space<vmem>>, %arg3: memref<16x128xf32, #tpu.memory_space<vmem>>, %arg4: memref<1x1xf32, #tpu.memory_space<smem>>, %arg5: memref<16x128xf32, #tpu.memory_space<vmem>>) attributes {dimension_semantics = [#tpu.dimension_semantics<parallel>, #tpu.dimension_semantics<arbitrary>], iteration_bounds = array<i64: 1, 1>, scalar_prefetch = 0 : i64, scratch_operands = 1 : i64, tpu.core_type = #tpu.core_type<tc>, window_params = [{transform_indices = @transform_0, window_bounds = array<i64: 16, 128>}, {transform_indices = @transform_1, window_bounds = array<i64: 16, 128>}, {transform_indices = @transform_2, window_bounds = array<i64: 1, 1>}]} {
    %c0_i32 = arith.constant 0 : i32
    %0 = arith.cmpi eq, %arg1, %c0_i32 : i32
    %1 = arith.extui %0 : i1 to i32
    %c0_i32_0 = arith.constant 0 : i32
    %2 = arith.cmpi ne, %1, %c0_i32_0 : i32
    scf.if %2 {
      %cst_12 = arith.constant 0.000000e+00 : f32
      %26 = vector.broadcast %cst_12 : f32 to vector<16x128xf32>
      %c0_13 = arith.constant 0 : index
      %c0_14 = arith.constant 0 : index
      %27 = vector.load %arg5[%c0_13, %c0_14] : memref<16x128xf32, #tpu.memory_space<vmem>>, vector<16x128xf32>
      tpu.vector_store %arg5[%c0_13, %c0_14], %26 {strides = array<i32>} : memref<16x128xf32, #tpu.memory_space<vmem>>, vector<16x128xf32>,
    } else {
    }
    %c0 = arith.constant 0 : index
    %c0_1 = arith.constant 0 : index
    %3 = vector.load %arg2[%c0, %c0_1] : memref<16x128xf32, #tpu.memory_space<vmem>>, vector<16x128xf32>
    %c0_2 = arith.constant 0 : index
    %c0_3 = arith.constant 0 : index
    %4 = vector.load %arg3[%c0_2, %c0_3] : memref<16x128xf32, #tpu.memory_space<vmem>>, vector<16x128xf32>
    %5 = arith.subf %3, %4 : vector<16x128xf32>
    %6 = math.absf %5 : vector<16x128xf32>
    %7 = math.absf %4 : vector<16x128xf32>
    %8 = math.absf %3 : vector<16x128xf32>
    %9 = arith.addf %7, %8 : vector<16x128xf32>
    %cst = arith.constant 1.000000e-10 : f32
    %10 = vector.broadcast %cst : f32 to vector<16x128xf32>
    %11 = arith.addf %9, %10 : vector<16x128xf32>
    %12 = tpu.reciprocal %11 {approx = true} : vector<16x128xf32> -> vector<16x128xf32>
    %13 = arith.mulf %11, %12 : vector<16x128xf32>
    %cst_4 = arith.constant 2.000000e+00 : f32
    %14 = vector.broadcast %cst_4 : f32 to vector<16x128xf32>
    %15 = arith.subf %14, %13 : vector<16x128xf32>
    %16 = arith.mulf %12, %15 : vector<16x128xf32>
    %c0_5 = arith.constant 0 : index
    %c0_6 = arith.constant 0 : index
    %17 = vector.load %arg5[%c0_5, %c0_6] : memref<16x128xf32, #tpu.memory_space<vmem>>, vector<16x128xf32>
    %18 = arith.mulf %6, %16 : vector<16x128xf32>
    %cst_7 = arith.constant 2.000000e+02 : f32
    %19 = vector.broadcast %cst_7 : f32 to vector<16x128xf32>
    %20 = arith.mulf %18, %19 : vector<16x128xf32>
    %21 = arith.addf %17, %20 : vector<16x128xf32>
    %c0_8 = arith.constant 0 : index
    %c0_9 = arith.constant 0 : index
    %22 = vector.load %arg5[%c0_8, %c0_9] : memref<16x128xf32, #tpu.memory_space<vmem>>, vector<16x128xf32>
    tpu.vector_store %arg5[%c0_8, %c0_9], %21 {strides = array<i32>} : memref<16x128xf32, #tpu.memory_space<vmem>>, vector<16x128xf32>,
    %c0_i32_10 = arith.constant 0 : i32
    %23 = arith.cmpi eq, %arg1, %c0_i32_10 : i32
    %24 = arith.extui %23 : i1 to i32
    %c0_i32_11 = arith.constant 0 : i32
    %25 = arith.cmpi ne, %24, %c0_i32_11 : i32
    scf.if %25 {
      %c0_12 = arith.constant 0 : index
      %c0_13 = arith.constant 0 : index
      %26 = vector.load %arg5[%c0_12, %c0_13] : memref<16x128xf32, #tpu.memory_space<vmem>>, vector<16x128xf32>
      %27 = vector.shape_cast %26 : vector<16x128xf32> to vector<1x16x128xf32>
      %cst_14 = arith.constant dense<0.000000e+00> : vector<1xf32>
      %28 = vector.multi_reduction <add>, %27, %cst_14 [1, 2] : vector<1x16x128xf32> to vector<1xf32>
      %29 = vector.shape_cast %28 : vector<1xf32> to vector<1x1x1xf32>
      %30 = vector.extract %29[0, 0, 0] : f32 from vector<1x1x1xf32>
      %c0_15 = arith.constant 0 : index
      %c0_16 = arith.constant 0 : index
      %31 = memref.load %arg4[%c0_15, %c0_16] : memref<1x1xf32, #tpu.memory_space<smem>>
      memref.store %30, %arg4[%c0_15, %c0_16] : memref<1x1xf32, #tpu.memory_space<smem>>
    } else {
    }
    return
  }
  func.func @transform_0(%arg0: i32, %arg1: i32) -> (i32, i32) {
    %c1_i32 = arith.constant 1 : i32
    %0 = arith.muli %arg0, %c1_i32 : i32
    %1 = arith.addi %0, %arg1 : i32
    %c0_i32 = arith.constant 0 : i32
    %2 = arith.minsi %1, %c0_i32 : i32
    %c0_i32_0 = arith.constant 0 : i32
    %c0_i32_1 = arith.constant 0 : i32
    return %2, %c0_i32_0 : i32, i32
  }
  func.func @transform_1(%arg0: i32, %arg1: i32) -> (i32, i32) {
    %c1_i32 = arith.constant 1 : i32
    %0 = arith.muli %arg0, %c1_i32 : i32
    %1 = arith.addi %0, %arg1 : i32
    %c0_i32 = arith.constant 0 : i32
    %2 = arith.minsi %1, %c0_i32 : i32
    %c0_i32_0 = arith.constant 0 : i32
    %c0_i32_1 = arith.constant 0 : i32
    return %2, %c0_i32_0 : i32, i32
  }
  func.func @transform_2(%arg0: i32, %arg1: i32) -> (i32, i32) {
    %c0_i32 = arith.constant 0 : i32
    %c0_i32_0 = arith.constant 0 : i32
    return %arg0, %c0_i32 : i32, i32
  }
}

</mosaic_0001>

<llo_original>
// kernel: smape_loss.1
$region0: #{smape_loss.1}
  #allocation0 [shape = 'u32[]', space=smem, size = 0x4, offset = 0x4, fixed_abs, tag = 'smem constant byte address 0x4 - core index']
  #allocation1 [shape = 'u32[72,128]{1,0:T(1,128)}', space=vmem, size = 0x9000, scoped, tag = 'internal scratch']
  #allocation2 [shape = 'f32[16,128]{1,0:T(8,128)}', space=vmem, size = 0x2000, scoped, tag = 'scratch operand']
  %s0 = inlined_call_operand.vmem [shape: f32[16,128], index: 0, kind: input, shape index: {}]
  %s1 = inlined_call_operand.vmem [shape: f32[16,128], index: 1, kind: input, shape index: {}]
  %s2 = inlined_call_operand.hbm [shape: f32[1,1], index: 2, kind: output, shape index: {}]
  %s3 = sld [smem:[#allocation0]]
  $region26: #{smape_loss.1} parent=0
    _
  %s5 = ssub.s32 1, %s3
  %s6 = scalar_select 0, %s5, %s3
  $region1: #{smape_loss.1} parent=0
    #allocation3 [shape = 'u8[512]{0}', space=smem, size = 0x200, scoped, tag = 'output window, operand 0, single buffered']
    #allocation4 [shape = 's32[1]{0}', space=sflag, size = 0x4, scoped, tag = 'scoped memory for smape_loss.1']
    %7 = vsyncpa [#allocation4], 0
    // Predicated region
    $region2: #{smape_loss.1} parent=1 // pred_check
      _
    $region3: #{smape_loss.1} parent=1 // pred_check_branch
      %9 = sbr.rel (0) target = $region5
    $region4: #{smape_loss.1} parent=1 // pred_region
      %s10 = sadd.s32 0, 0
      %p11 = scmp.lt.s32.totalorder %s10, 0
      %s12 = scalar_select %p11, %s10, 0
      %s13 = smul.u32 2, %s12
      %p14 = scmp.lt.s32.totalorder %s13, 1
      %s15 = scalar_select %p14, %s13, 1
      %s16 = smul.addr %s15, 8
      %s17 = scalar_lea.vmem %s0, %s16
      %s18 = sadd.s32 0, 0
      %p19 = scmp.lt.s32.totalorder %s18, 0
      %s20 = scalar_select %p19, %s18, 0
      %s21 = smul.u32 2, %s20
    $region5: #{smape_loss.1} parent=1 // pred_fallthru
      _
    // Predicated region
    $region6: #{smape_loss.1} parent=1 // pred_check
      _
    $region7: #{smape_loss.1} parent=1 // pred_check_branch
      %23 = sbr.rel (0) target = $region9
    $region8: #{smape_loss.1} parent=1 // pred_region
      %s24 = sadd.s32 0, 0
      %p25 = scmp.lt.s32.totalorder %s24, 0
      %s26 = scalar_select %p25, %s24, 0
      %s27 = smul.u32 2, %s26
      %p28 = scmp.lt.s32.totalorder %s27, 1
      %s29 = scalar_select %p28, %s27, 1
      %s30 = smul.addr %s29, 8
      %s31 = scalar_lea.vmem %s1, %s30
      %s32 = sadd.s32 0, 0
      %p33 = scmp.lt.s32.totalorder %s32, 0
      %s34 = scalar_select %p33, %s32, 0
      %s35 = smul.u32 2, %s34
    $region9: #{smape_loss.1} parent=1 // pred_fallthru
      _
    %s36 = sadd.s32 0, 0
    %p37 = scmp.lt.s32.totalorder %s36, 0
    %s38 = scalar_select %p37, %s36, 0
    %s39 = smul.u32 2, %s38
    %p40 = scmp.lt.s32.totalorder %s39, 1
    %s41 = scalar_select %p40, %s39, 1
    %s42 = smul.addr %s41, 8
    %s43 = scalar_lea.vmem %s0, %s42
    %s44 = sadd.s32 0, 0
    %p45 = scmp.lt.s32.totalorder %s44, 0
    %s46 = scalar_select %p45, %s44, 0
    %s47 = smul.u32 2, %s46
    %p48 = scmp.lt.s32.totalorder %s47, 1
    %s49 = scalar_select %p48, %s47, 1
    %s50 = smul.addr %s49, 8
    %s51 = scalar_lea.vmem %s1, %s50
    %s52 = sadd.s32 0, 0
    %p53 = scmp.lt.s32.totalorder %s52, 0
    %s54 = scalar_select %p53, %s52, 0
    %s55 = smul.u32 2, %s54
    %p56 = scmp.lt.s32.totalorder %s55, 1
    %s57 = scalar_select %p56, %s55, 1
    %s58 = smul.addr %s57, 8
    %s59 = scalar_lea.vmem %s0, %s58
    %s60 = sadd.s32 0, 0
    %p61 = scmp.lt.s32.totalorder %s60, 0
    %s62 = scalar_select %p61, %s60, 0
    %s63 = smul.u32 2, %s62
    %s64 = sadd.s32 0, 0
    %p65 = scmp.lt.s32.totalorder %s64, 0
    %s66 = scalar_select %p65, %s64, 0
    %s67 = smul.u32 2, %s66
    %p68 = scmp.lt.s32.totalorder %s67, 1
    %s69 = scalar_select %p68, %s67, 1
    %s70 = smul.addr %s69, 8
    %s71 = scalar_lea.vmem %s1, %s70
    %s72 = sadd.s32 0, 0
    %p73 = scmp.lt.s32.totalorder %s72, 0
    %s74 = scalar_select %p73, %s72, 0
    %s75 = smul.u32 2, %s74
    %p76 = scmp.eq.s32.totalorder 0, 0
    // Predicated region
    $region10: #{smape_loss.1} parent=1 // pred_check
      %p77 = pneg %p76
    $region11: #{smape_loss.1} parent=1 // pred_check_branch
      %79 = sbr.rel (%p77) target = $region13
    $region12: #{smape_loss.1} parent=1 // pred_region
      %80 = vst [vmem:[#allocation2] sm:$0xff] 0.0
      %81 = vst [vmem:[#allocation2 + $0x8] sm:$0xff] 0.0
    $region13: #{smape_loss.1} parent=1 // pred_fallthru
      _
    %v82 = vld [vmem:[%s59] sm:$0xff]
    %v83 = vld [vmem:[%s59 + $0x8] sm:$0xff]
    %v84 = vld [vmem:[%s71] sm:$0xff]
    %v85 = vld [vmem:[%s71 + $0x8] sm:$0xff]
    %v86 = vsub.f32 %v82, %v84
    %v87 = vsub.f32 %v83, %v85
    %v88 = vand.u32 2147483647, %v86
    %v89 = vand.u32 2147483647, %v87
    %v90 = vand.u32 2147483647, %v84
    %v91 = vand.u32 2147483647, %v85
    %v92 = vand.u32 2147483647, %v82
    %v93 = vand.u32 2147483647, %v83
    %v94 = vadd.f32 %v90, %v92
    %v95 = vadd.f32 %v91, %v93
    %v96 = vadd.f32 %v94, 1e-10
    %v97 = vadd.f32 %v95, 1e-10
    %v98 = vrcp.pop %v96
    %v99 = vrcp.pop %v97
    %v100 = vmul.f32 %v96, %v98
    %v101 = vmul.f32 %v97, %v99
    %v102 = vsub.f32 2.0, %v100
    %v103 = vsub.f32 2.0, %v101
    %v104 = vmul.f32 %v98, %v102
    %v105 = vmul.f32 %v99, %v103
    %v106 = vld [vmem:[#allocation2] sm:$0xff]
    %v107 = vld [vmem:[#allocation2 + $0x8] sm:$0xff]
    %v108 = vmul.f32 %v88, %v104
    %v109 = vmul.f32 %v89, %v105
    %v110 = vmul.f32 %v108, 200.0
    %v111 = vmul.f32 %v109, 200.0
    %v112 = vadd.f32 %v106, %v110
    %v113 = vadd.f32 %v107, %v111
    %114 = vst [vmem:[#allocation2] sm:$0xff] %v112
    %115 = vst [vmem:[#allocation2 + $0x8] sm:$0xff] %v113
    // Predicated region
    $region14: #{smape_loss.1} parent=1 // pred_check
      %p116 = pneg %p76
    $region15: #{smape_loss.1} parent=1 // pred_check_branch
      %118 = sbr.rel (%p116) target = $region17
    $region16: #{smape_loss.1} parent=1 // pred_region
      %v119 = vld [vmem:[#allocation2] sm:$0xff]
      %v120 = vld [vmem:[#allocation2 + $0x8] sm:$0xff]
      %v121 = vadd.f32 %v119, %v120
      %122 = vadd.xlane.f32.xlu0 %v121
      %v123 = vpop.xlane.xlu0 %122
      %v124 = vrot.slane %v123, 4
      %v125 = vadd.f32 %v123, %v124
      %v126 = vrot.slane %v125, 2
      %v127 = vadd.f32 %v125, %v126
      %v128 = vrot.slane %v127, 1
      %v129 = vadd.f32 %v127, %v128
      %s130 = vtos %v129
      %s131 = scalar_lea.smem [#allocation3], 0
      %132 = sst [smem:[%s131]] %s130
    $region17: #{smape_loss.1} parent=1 // pred_fallthru
      _
    // Predicated region
    $region18: #{smape_loss.1} parent=1 // pred_check
      _
    $region19: #{smape_loss.1} parent=1 // pred_check_branch
      %134 = sbr.rel (0) target = $region21
    $region20: #{smape_loss.1} parent=1 // pred_region
      %136 = vsyncadd [#allocation4], 0
      %s138 = sshll.u32 %s2, 4
      %s139 = int_to_ptr.hbm [resolvable:$true] %s138
      %141 = dma.smem_to_hbm [#allocation3], 16, %s139, [#allocation4]
    $region21: #{smape_loss.1} parent=1 // pred_fallthru
      _
    // Predicated region
    $region22: #{smape_loss.1} parent=1 // pred_check
      _
    $region23: #{smape_loss.1} parent=1 // pred_check_branch
      %143 = sbr.rel (0) target = $region25
    $region24: #{smape_loss.1} parent=1 // pred_region
      %145 = dma.done [#allocation4], 16
    $region25: #{smape_loss.1} parent=1 // pred_fallthru
      _
    %146 = sfence
    %147 = vsyncpa [#allocation4], 1

</llo_original>
